<compile_context>
chip_gen: v7x
topology: tpu7x:2x2x1
jax: 0.10.0
libtpu: 0.0.40
codegen_flags: <defaults>
</compile_context>

<pallas_src>
import math
import functools

import jax
import jax.numpy as jnp
from jax import lax
from jax.experimental import pallas as pl
from jax.experimental.pallas import tpu as pltpu


def _round_up(x, m):
    return ((x + m - 1) // m) * m


def _var_rnn_layer_kernel(x_ref, wih_t_ref, bias_ref, whh_t_ref, out_ref,
                          h_scratch, xp_scratch, *, unroll):
    """One (batch-block, time-chunk) grid step of a tanh-RNN layer.

    x_ref:      (tc, bb, Fp)  raw input chunk (time-major, padded)
    wih_t_ref:  (Fp, Hp)      W_ih^T (constant across the grid)
    bias_ref:   (1, Hp)       b_ih + b_hh (constant)
    whh_t_ref:  (Hp, Hp)      W_hh^T (constant)
    out_ref:    (tc, bb, Hp)  per-step hidden outputs
    h_scratch:  (bb, Hp) f32  hidden-state carry across time chunks
    xp_scratch: (tc, bb, Hp) f32  fused input projection for this chunk
    """
    # hx=None -> zero initial hidden state; re-init at the first time chunk of
    # every batch block (time axis is the innermost grid axis).
    @pl.when(pl.program_id(1) == 0)
    def _():
        h_scratch[...] = jnp.zeros_like(h_scratch)

    tc, bb, fp = x_ref.shape
    hp = whh_t_ref.shape[0]

    # Fused, time-independent input projection: one large MXU GEMM for the whole
    # chunk (fills MXU while the serial recurrence below is latency-bound).
    xp_scratch[...] = (
        jnp.dot(x_ref[...].reshape(tc * bb, fp).astype(jnp.float32),
                wih_t_ref[...],
                preferred_element_type=jnp.float32)
        + bias_ref[...]
    ).reshape(tc, bb, hp)

    whh_t = whh_t_ref[...]  # resident across the time loop (pre-transposed)

    def step(t, h):
        pre = xp_scratch[t] + jnp.dot(h, whh_t, preferred_element_type=jnp.float32)
        h_new = jnp.tanh(pre)
        out_ref[t] = h_new.astype(out_ref.dtype)
        return h_new

    # Serial recurrence within the chunk; h stays in vregs between steps.
    h_scratch[...] = lax.fori_loop(0, tc, step, h_scratch[...], unroll=unroll)


def _run_layer(act, wih, whh, bih, bhh, *, tc, batch_block=None):
    """One layer over the full (already padded) sequence.

    act: (Tp, Bp, Fp)  padded, time-major activations (zeros in padded slots)
    wih: (H, in_sz), whh: (H, H), bih/bhh: (H,)
    returns padded output (Tp, Bp, Hp).
    """
    Tp, Bp, Fp = act.shape
    H, in_sz = wih.shape
    # Lane-aligned hidden size. (On v6e/v7x with H>128 a 256-multiple would match the
    # 2x256^2 MXU better; kept at 128 here since the test H is tiny.)
    Hp = _round_up(H, 128)

    # Pad the (small) weights/bias instead of the (large) activations.
    wih_t = jnp.pad(wih.T.astype(jnp.float32), ((0, Fp - in_sz), (0, Hp - H)))
    whh_t = jnp.pad(whh.T.astype(jnp.float32), ((0, Hp - H), (0, Hp - H)))
    bias = jnp.pad((bih + bhh).astype(jnp.float32), (0, Hp - H)).reshape(1, Hp)

    # Batch blocking: default one block (no grid overhead on v5e/v6e); split for
    # megacore batch-parallelism on v7x when B is large.
    if batch_block is None:
        bb = Bp
    else:
        bb = min(_round_up(batch_block, 8), Bp)
        assert Bp % bb == 0, "batch_block must evenly divide the padded batch"
    num_b = Bp // bb
    num_chunks = Tp // tc

    unroll = True if tc <= 32 else 8

    elt = jnp.dtype(act.dtype).itemsize
    vmem_est = (
        2 * tc * bb * (Fp + Hp) * elt          # double-buffered x / out chunks
        + 2 * (Fp * Hp + Hp * Hp + Hp) * 4     # weight + bias blocks
        + (bb * Hp + tc * bb * Hp) * 4         # scratch (h carry + projection)
    )
    # Leave headroom under v7x's 64 MiB physical VMEM.
    vmem_limit = int(min(max(2 * vmem_est, 32 * 1024 * 1024), 48 * 1024 * 1024))

    out = pl.pallas_call(
        functools.partial(_var_rnn_layer_kernel, unroll=unroll),
        out_shape=jax.ShapeDtypeStruct((Tp, Bp, Hp), act.dtype),
        grid_spec=pltpu.PrefetchScalarGridSpec(
            num_scalar_prefetch=0,
            grid=(num_b, num_chunks),
            in_specs=[
                pl.BlockSpec((tc, bb, Fp), lambda b, c: (c, b, 0)),  # x time chunk
                pl.BlockSpec((Fp, Hp),     lambda b, c: (0, 0)),     # W_ih^T (constant)
                pl.BlockSpec((1, Hp),      lambda b, c: (0, 0)),     # bias (constant)
                pl.BlockSpec((Hp, Hp),     lambda b, c: (0, 0)),     # W_hh^T (constant)
            ],
            out_specs=pl.BlockSpec((tc, bb, Hp), lambda b, c: (c, b, 0)),
            scratch_shapes=[
                pltpu.VMEM((bb, Hp), jnp.float32),       # hidden carry
                pltpu.VMEM((tc, bb, Hp), jnp.float32),   # fused projection buffer
            ],
        ),
        compiler_params=pltpu.CompilerParams(
            dimension_semantics=("parallel", "arbitrary"),  # batch || , time serial
            vmem_limit_bytes=vmem_limit,
        ),
    )(act, wih_t, bias, whh_t)
    return out


def var_masked_rnn_forward(x, layer_params, *, time_chunk=64, batch_block=None):
    """VarMaskedRNNBase.forward with mask=None, hx=None, batch_first=False,
    bidirectional=False, dropout=(0,0).

    x: (T, B, input_size), layer_params: list of (W_ih, W_hh, b_ih, b_hh).
    Returns (output (T, B, H), hidden (num_layers, B, H)).
    """
    T, B, I = x.shape
    H = layer_params[0][1].shape[0]

    Bp = _round_up(B, 8)
    Ip = _round_up(I, 128)
    Hp = _round_up(H, 128)
    tc = min(time_chunk, max(T, 1))
    Tp = _round_up(T, tc)

    # Pad ONCE at the top; padded layout is kept between layers and sliced once at
    # the end (the padded time steps past T-1 compute garbage that is never used).
    act = jnp.pad(x, ((0, Tp - T), (0, Bp - B), (0, Ip - I)))

    h_finals = []
    for (wih, whh, bih, bhh) in layer_params:
        act = _run_layer(act, wih, whh, bih, bhh, tc=tc, batch_block=batch_block)
        # Final hidden of this layer == hidden at the LAST REAL timestep (T-1, not Tp-1).
        h_finals.append(act[T - 1, :B, :H])

    output = act[:T, :B, :H]
    hidden = jnp.stack(h_finals, axis=0)
    return output, hidden


# -------- pure-JAX reference (for correctness check) --------
def _ref_layer(x, h0, wih, whh, bih, bhh):
    def step(h, xt):
        h_new = jnp.tanh(xt @ wih.T + bih + h @ whh.T + bhh)
        return h_new, h_new
    hN, ys = jax.lax.scan(step, h0, x)
    return ys, hN


def _ref_forward(x, layer_params):
    T, B, _ = x.shape
    h_finals = []
    inp = x
    for (wih, whh, bih, bhh) in layer_params:
        H = whh.shape[0]
        out, hN = _ref_layer(inp, jnp.zeros((B, H), x.dtype), wih, whh, bih, bhh)
        h_finals.append(hN)
        inp = out
    return inp, jnp.stack(h_finals, axis=0)


def init_params(key, input_size, hidden_size, num_layers):
    """Deterministic init mimicking nn.RNNCell.reset_parameters (uniform +-1/sqrt(H))."""
    params = []
    stdv = 1.0 / math.sqrt(hidden_size)
    for layer in range(num_layers):
        in_sz = input_size if layer == 0 else hidden_size
        key, k1, k2, k3, k4 = jax.random.split(key, 5)
        wih = jax.random.uniform(k1, (hidden_size, in_sz), jnp.float32, -stdv, stdv)
        whh = jax.random.uniform(k2, (hidden_size, hidden_size), jnp.float32, -stdv, stdv)
        bih = jax.random.uniform(k3, (hidden_size,), jnp.float32, -stdv, stdv)
        bhh = jax.random.uniform(k4, (hidden_size,), jnp.float32, -stdv, stdv)
        params.append((wih, whh, bih, bhh))
    return params


if __name__ == "__main__":
    # Small shapes consistent with the module's forward (batch_first=False):
    # input: (seq_len=8, batch=2, input_size=32), hidden_size=32, num_layers=2.
    T, B, I, H, L = 8, 2, 32, 32, 2

    key = jax.random.PRNGKey(0)
    key, kx = jax.random.split(key)
    x = jax.random.normal(kx, (T, B, I), jnp.float32)

    params = init_params(key, I, H, L)

    fwd = jax.jit(functools.partial(var_masked_rnn_forward, time_chunk=64))
    out, hidden = fwd(x, params)
    out = jax.block_until_ready(out)
    hidden = jax.block_until_ready(hidden)

    ref_out, ref_hidden = _ref_forward(x, params)
    assert out.shape == (T, B, H)
    assert hidden.shape == (L, B, H)
    assert jnp.allclose(out, ref_out, atol=1e-4, rtol=1e-4)
    assert jnp.allclose(hidden, ref_hidden, atol=1e-4, rtol=1e-4)

    print("KERNEL_OK")
</pallas_src>

<mosaic_0001>
module attributes {stable_mosaic.version = 11 : i64} {
  func.func @_var_rnn_layer_kernel(%arg0: i32, %arg1: i32, %arg2: memref<8x8x128xf32, #tpu.memory_space<vmem>>, %arg3: memref<128x128xf32, #tpu.memory_space<vmem>>, %arg4: memref<1x128xf32, #tpu.memory_space<vmem>>, %arg5: memref<128x128xf32, #tpu.memory_space<vmem>>, %arg6: memref<8x8x128xf32, #tpu.memory_space<vmem>>, %arg7: memref<8x128xf32, #tpu.memory_space<vmem>>, %arg8: memref<8x8x128xf32, #tpu.memory_space<vmem>>) attributes {dimension_semantics = [#tpu.dimension_semantics<parallel>, #tpu.dimension_semantics<arbitrary>], iteration_bounds = array<i64: 1, 1>, scalar_prefetch = 0 : i64, scratch_operands = 2 : i64, tpu.core_type = #tpu.core_type<tc>, window_params = [{transform_indices = @transform_0, window_bounds = array<i64: 8, 8, 128>}, {pipeline_mode = #tpu.pipeline_mode<synchronous>, transform_indices = @transform_1, window_bounds = array<i64: 128, 128>}, {pipeline_mode = #tpu.pipeline_mode<synchronous>, transform_indices = @transform_2, window_bounds = array<i64: 1, 128>}, {pipeline_mode = #tpu.pipeline_mode<synchronous>, transform_indices = @transform_3, window_bounds = array<i64: 128, 128>}, {transform_indices = @transform_4, window_bounds = array<i64: 8, 8, 128>}]} {
    %c0_i32 = arith.constant 0 : i32
    %0 = arith.cmpi eq, %arg1, %c0_i32 : i32
    %1 = arith.extui %0 : i1 to i32
    %c0_i32_0 = arith.constant 0 : i32
    %2 = arith.cmpi ne, %1, %c0_i32_0 : i32
    scf.if %2 {
      %cst_57 = arith.constant 0.000000e+00 : f32
      %95 = vector.broadcast %cst_57 : f32 to vector<8x128xf32>
      %c0_58 = arith.constant 0 : index
      %c0_59 = arith.constant 0 : index
      %96 = vector.load %arg7[%c0_58, %c0_59] : memref<8x128xf32, #tpu.memory_space<vmem>>, vector<8x128xf32>
      tpu.vector_store %arg7[%c0_58, %c0_59], %95 {strides = array<i32>} : memref<8x128xf32, #tpu.memory_space<vmem>>, vector<8x128xf32>,
    } else {
    }
    %c0 = arith.constant 0 : index
    %c0_1 = arith.constant 0 : index
    %c0_2 = arith.constant 0 : index
    %3 = vector.load %arg2[%c0, %c0_1, %c0_2] : memref<8x8x128xf32, #tpu.memory_space<vmem>>, vector<8x8x128xf32>
    %4 = vector.shape_cast %3 : vector<8x8x128xf32> to vector<64x128xf32>
    %c0_3 = arith.constant 0 : index
    %c0_4 = arith.constant 0 : index
    %5 = vector.load %arg3[%c0_3, %c0_4] : memref<128x128xf32, #tpu.memory_space<vmem>>, vector<128x128xf32>
    %cst = arith.constant dense<0.000000e+00> : vector<64x128xf32>
    %6 = tpu.matmul %4, %5, %cst {dimension_numbers = #tpu.dot_dimension_numbers<[1], [0], [0], [1], [0, 0, 1, 1], [], []>} : vector<64x128xf32>, vector<128x128xf32>, vector<64x128xf32> -> vector<64x128xf32>
    %c0_5 = arith.constant 0 : index
    %c0_6 = arith.constant 0 : index
    %7 = vector.load %arg4[%c0_5, %c0_6] : memref<1x128xf32, #tpu.memory_space<vmem>>, vector<1x128xf32>
    %8 = vector.broadcast %7 : vector<1x128xf32> to vector<64x128xf32>
    %9 = arith.addf %6, %8 : vector<64x128xf32>
    %10 = vector.shape_cast %9 : vector<64x128xf32> to vector<8x8x128xf32>
    %c0_7 = arith.constant 0 : index
    %c0_8 = arith.constant 0 : index
    %c0_9 = arith.constant 0 : index
    %11 = vector.load %arg8[%c0_7, %c0_8, %c0_9] : memref<8x8x128xf32, #tpu.memory_space<vmem>>, vector<8x8x128xf32>
    tpu.vector_store %arg8[%c0_7, %c0_8, %c0_9], %10 {strides = array<i32>} : memref<8x8x128xf32, #tpu.memory_space<vmem>>, vector<8x8x128xf32>,
    %c0_10 = arith.constant 0 : index
    %c0_11 = arith.constant 0 : index
    %12 = vector.load %arg5[%c0_10, %c0_11] : memref<128x128xf32, #tpu.memory_space<vmem>>, vector<128x128xf32>
    %c0_12 = arith.constant 0 : index
    %c0_13 = arith.constant 0 : index
    %13 = vector.load %arg7[%c0_12, %c0_13] : memref<8x128xf32, #tpu.memory_space<vmem>>, vector<8x128xf32>
    %c0_i32_14 = arith.constant 0 : i32
    %14 = arith.index_cast %c0_i32_14 : i32 to index
    %c0_15 = arith.constant 0 : index
    %c0_16 = arith.constant 0 : index
    %15 = vector.load %arg8[%14, %c0_15, %c0_16] : memref<8x8x128xf32, #tpu.memory_space<vmem>>, vector<1x8x128xf32>
    %16 = vector.shape_cast %15 : vector<1x8x128xf32> to vector<8x128xf32>
    %cst_17 = arith.constant dense<0.000000e+00> : vector<8x128xf32>
    %17 = tpu.matmul %13, %12, %cst_17 {dimension_numbers = #tpu.dot_dimension_numbers<[1], [0], [0], [1], [0, 0, 1, 1], [], []>} : vector<8x128xf32>, vector<128x128xf32>, vector<8x128xf32> -> vector<8x128xf32>
    %18 = arith.addf %16, %17 : vector<8x128xf32>
    %19 = math.tanh %18 : vector<8x128xf32>
    %20 = arith.index_cast %c0_i32_14 : i32 to index
    %c0_18 = arith.constant 0 : index
    %c0_19 = arith.constant 0 : index
    %21 = vector.load %arg6[%20, %c0_18, %c0_19] : memref<8x8x128xf32, #tpu.memory_space<vmem>>, vector<1x8x128xf32>
    %22 = vector.shape_cast %21 : vector<1x8x128xf32> to vector<8x128xf32>
    %23 = vector.shape_cast %19 : vector<8x128xf32> to vector<1x8x128xf32>
    tpu.vector_store %arg6[%20, %c0_18, %c0_19], %23 {strides = array<i32>} : memref<8x8x128xf32, #tpu.memory_space<vmem>>, vector<1x8x128xf32>,
    %c1_i32 = arith.constant 1 : i32
    %24 = arith.index_cast %c1_i32 : i32 to index
    %c0_20 = arith.constant 0 : index
    %c0_21 = arith.constant 0 : index
    %25 = vector.load %arg8[%24, %c0_20, %c0_21] : memref<8x8x128xf32, #tpu.memory_space<vmem>>, vector<1x8x128xf32>
    %26 = vector.shape_cast %25 : vector<1x8x128xf32> to vector<8x128xf32>
    %cst_22 = arith.constant dense<0.000000e+00> : vector<8x128xf32>
    %27 = tpu.matmul %19, %12, %cst_22 {dimension_numbers = #tpu.dot_dimension_numbers<[1], [0], [0], [1], [0, 0, 1, 1], [], []>} : vector<8x128xf32>, vector<128x128xf32>, vector<8x128xf32> -> vector<8x128xf32>
    %28 = arith.addf %26, %27 : vector<8x128xf32>
    %29 = math.tanh %28 : vector<8x128xf32>
    %30 = arith.index_cast %c1_i32 : i32 to index
    %c0_23 = arith.constant 0 : index
    %c0_24 = arith.constant 0 : index
    %31 = vector.load %arg6[%30, %c0_23, %c0_24] : memref<8x8x128xf32, #tpu.memory_space<vmem>>, vector<1x8x128xf32>
    %32 = vector.shape_cast %31 : vector<1x8x128xf32> to vector<8x128xf32>
    %33 = vector.shape_cast %29 : vector<8x128xf32> to vector<1x8x128xf32>
    tpu.vector_store %arg6[%30, %c0_23, %c0_24], %33 {strides = array<i32>} : memref<8x8x128xf32, #tpu.memory_space<vmem>>, vector<1x8x128xf32>,
    %c2_i32 = arith.constant 2 : i32
    %34 = arith.index_cast %c2_i32 : i32 to index
    %c0_25 = arith.constant 0 : index
    %c0_26 = arith.constant 0 : index
    %35 = vector.load %arg8[%34, %c0_25, %c0_26] : memref<8x8x128xf32, #tpu.memory_space<vmem>>, vector<1x8x128xf32>
    %36 = vector.shape_cast %35 : vector<1x8x128xf32> to vector<8x128xf32>
    %cst_27 = arith.constant dense<0.000000e+00> : vector<8x128xf32>
    %37 = tpu.matmul %29, %12, %cst_27 {dimension_numbers = #tpu.dot_dimension_numbers<[1], [0], [0], [1], [0, 0, 1, 1], [], []>} : vector<8x128xf32>, vector<128x128xf32>, vector<8x128xf32> -> vector<8x128xf32>
    %38 = arith.addf %36, %37 : vector<8x128xf32>
    %39 = math.tanh %38 : vector<8x128xf32>
    %40 = arith.index_cast %c2_i32 : i32 to index
    %c0_28 = arith.constant 0 : index
    %c0_29 = arith.constant 0 : index
    %41 = vector.load %arg6[%40, %c0_28, %c0_29] : memref<8x8x128xf32, #tpu.memory_space<vmem>>, vector<1x8x128xf32>
    %42 = vector.shape_cast %41 : vector<1x8x128xf32> to vector<8x128xf32>
    %43 = vector.shape_cast %39 : vector<8x128xf32> to vector<1x8x128xf32>
    tpu.vector_store %arg6[%40, %c0_28, %c0_29], %43 {strides = array<i32>} : memref<8x8x128xf32, #tpu.memory_space<vmem>>, vector<1x8x128xf32>,
    %c3_i32 = arith.constant 3 : i32
    %44 = arith.index_cast %c3_i32 : i32 to index
    %c0_30 = arith.constant 0 : index
    %c0_31 = arith.constant 0 : index
    %45 = vector.load %arg8[%44, %c0_30, %c0_31] : memref<8x8x128xf32, #tpu.memory_space<vmem>>, vector<1x8x128xf32>
    %46 = vector.shape_cast %45 : vector<1x8x128xf32> to vector<8x128xf32>
    %cst_32 = arith.constant dense<0.000000e+00> : vector<8x128xf32>
    %47 = tpu.matmul %39, %12, %cst_32 {dimension_numbers = #tpu.dot_dimension_numbers<[1], [0], [0], [1], [0, 0, 1, 1], [], []>} : vector<8x128xf32>, vector<128x128xf32>, vector<8x128xf32> -> vector<8x128xf32>
    %48 = arith.addf %46, %47 : vector<8x128xf32>
    %49 = math.tanh %48 : vector<8x128xf32>
    %50 = arith.index_cast %c3_i32 : i32 to index
    %c0_33 = arith.constant 0 : index
    %c0_34 = arith.constant 0 : index
    %51 = vector.load %arg6[%50, %c0_33, %c0_34] : memref<8x8x128xf32, #tpu.memory_space<vmem>>, vector<1x8x128xf32>
    %52 = vector.shape_cast %51 : vector<1x8x128xf32> to vector<8x128xf32>
    %53 = vector.shape_cast %49 : vector<8x128xf32> to vector<1x8x128xf32>
    tpu.vector_store %arg6[%50, %c0_33, %c0_34], %53 {strides = array<i32>} : memref<8x8x128xf32, #tpu.memory_space<vmem>>, vector<1x8x128xf32>,
    %c4_i32 = arith.constant 4 : i32
    %54 = arith.index_cast %c4_i32 : i32 to index
    %c0_35 = arith.constant 0 : index
    %c0_36 = arith.constant 0 : index
    %55 = vector.load %arg8[%54, %c0_35, %c0_36] : memref<8x8x128xf32, #tpu.memory_space<vmem>>, vector<1x8x128xf32>
    %56 = vector.shape_cast %55 : vector<1x8x128xf32> to vector<8x128xf32>
    %cst_37 = arith.constant dense<0.000000e+00> : vector<8x128xf32>
    %57 = tpu.matmul %49, %12, %cst_37 {dimension_numbers = #tpu.dot_dimension_numbers<[1], [0], [0], [1], [0, 0, 1, 1], [], []>} : vector<8x128xf32>, vector<128x128xf32>, vector<8x128xf32> -> vector<8x128xf32>
    %58 = arith.addf %56, %57 : vector<8x128xf32>
    %59 = math.tanh %58 : vector<8x128xf32>
    %60 = arith.index_cast %c4_i32 : i32 to index
    %c0_38 = arith.constant 0 : index
    %c0_39 = arith.constant 0 : index
    %61 = vector.load %arg6[%60, %c0_38, %c0_39] : memref<8x8x128xf32, #tpu.memory_space<vmem>>, vector<1x8x128xf32>
    %62 = vector.shape_cast %61 : vector<1x8x128xf32> to vector<8x128xf32>
    %63 = vector.shape_cast %59 : vector<8x128xf32> to vector<1x8x128xf32>
    tpu.vector_store %arg6[%60, %c0_38, %c0_39], %63 {strides = array<i32>} : memref<8x8x128xf32, #tpu.memory_space<vmem>>, vector<1x8x128xf32>,
    %c5_i32 = arith.constant 5 : i32
    %64 = arith.index_cast %c5_i32 : i32 to index
    %c0_40 = arith.constant 0 : index
    %c0_41 = arith.constant 0 : index
    %65 = vector.load %arg8[%64, %c0_40, %c0_41] : memref<8x8x128xf32, #tpu.memory_space<vmem>>, vector<1x8x128xf32>
    %66 = vector.shape_cast %65 : vector<1x8x128xf32> to vector<8x128xf32>
    %cst_42 = arith.constant dense<0.000000e+00> : vector<8x128xf32>
    %67 = tpu.matmul %59, %12, %cst_42 {dimension_numbers = #tpu.dot_dimension_numbers<[1], [0], [0], [1], [0, 0, 1, 1], [], []>} : vector<8x128xf32>, vector<128x128xf32>, vector<8x128xf32> -> vector<8x128xf32>
    %68 = arith.addf %66, %67 : vector<8x128xf32>
    %69 = math.tanh %68 : vector<8x128xf32>
    %70 = arith.index_cast %c5_i32 : i32 to index
    %c0_43 = arith.constant 0 : index
    %c0_44 = arith.constant 0 : index
    %71 = vector.load %arg6[%70, %c0_43, %c0_44] : memref<8x8x128xf32, #tpu.memory_space<vmem>>, vector<1x8x128xf32>
    %72 = vector.shape_cast %71 : vector<1x8x128xf32> to vector<8x128xf32>
    %73 = vector.shape_cast %69 : vector<8x128xf32> to vector<1x8x128xf32>
    tpu.vector_store %arg6[%70, %c0_43, %c0_44], %73 {strides = array<i32>} : memref<8x8x128xf32, #tpu.memory_space<vmem>>, vector<1x8x128xf32>,
    %c6_i32 = arith.constant 6 : i32
    %74 = arith.index_cast %c6_i32 : i32 to index
    %c0_45 = arith.constant 0 : index
    %c0_46 = arith.constant 0 : index
    %75 = vector.load %arg8[%74, %c0_45, %c0_46] : memref<8x8x128xf32, #tpu.memory_space<vmem>>, vector<1x8x128xf32>
    %76 = vector.shape_cast %75 : vector<1x8x128xf32> to vector<8x128xf32>
    %cst_47 = arith.constant dense<0.000000e+00> : vector<8x128xf32>
    %77 = tpu.matmul %69, %12, %cst_47 {dimension_numbers = #tpu.dot_dimension_numbers<[1], [0], [0], [1], [0, 0, 1, 1], [], []>} : vector<8x128xf32>, vector<128x128xf32>, vector<8x128xf32> -> vector<8x128xf32>
    %78 = arith.addf %76, %77 : vector<8x128xf32>
    %79 = math.tanh %78 : vector<8x128xf32>
    %80 = arith.index_cast %c6_i32 : i32 to index
    %c0_48 = arith.constant 0 : index
    %c0_49 = arith.constant 0 : index
    %81 = vector.load %arg6[%80, %c0_48, %c0_49] : memref<8x8x128xf32, #tpu.memory_space<vmem>>, vector<1x8x128xf32>
    %82 = vector.shape_cast %81 : vector<1x8x128xf32> to vector<8x128xf32>
    %83 = vector.shape_cast %79 : vector<8x128xf32> to vector<1x8x128xf32>
    tpu.vector_store %arg6[%80, %c0_48, %c0_49], %83 {strides = array<i32>} : memref<8x8x128xf32, #tpu.memory_space<vmem>>, vector<1x8x128xf32>,
    %c7_i32 = arith.constant 7 : i32
    %84 = arith.index_cast %c7_i32 : i32 to index
    %c0_50 = arith.constant 0 : index
    %c0_51 = arith.constant 0 : index
    %85 = vector.load %arg8[%84, %c0_50, %c0_51] : memref<8x8x128xf32, #tpu.memory_space<vmem>>, vector<1x8x128xf32>
    %86 = vector.shape_cast %85 : vector<1x8x128xf32> to vector<8x128xf32>
    %cst_52 = arith.constant dense<0.000000e+00> : vector<8x128xf32>
    %87 = tpu.matmul %79, %12, %cst_52 {dimension_numbers = #tpu.dot_dimension_numbers<[1], [0], [0], [1], [0, 0, 1, 1], [], []>} : vector<8x128xf32>, vector<128x128xf32>, vector<8x128xf32> -> vector<8x128xf32>
    %88 = arith.addf %86, %87 : vector<8x128xf32>
    %89 = math.tanh %88 : vector<8x128xf32>
    %90 = arith.index_cast %c7_i32 : i32 to index
    %c0_53 = arith.constant 0 : index
    %c0_54 = arith.constant 0 : index
    %91 = vector.load %arg6[%90, %c0_53, %c0_54] : memref<8x8x128xf32, #tpu.memory_space<vmem>>, vector<1x8x128xf32>
    %92 = vector.shape_cast %91 : vector<1x8x128xf32> to vector<8x128xf32>
    %93 = vector.shape_cast %89 : vector<8x128xf32> to vector<1x8x128xf32>
    tpu.vector_store %arg6[%90, %c0_53, %c0_54], %93 {strides = array<i32>} : memref<8x8x128xf32, #tpu.memory_space<vmem>>, vector<1x8x128xf32>,
    %c8_i32 = arith.constant 8 : i32
    %c0_55 = arith.constant 0 : index
    %c0_56 = arith.constant 0 : index
    %94 = vector.load %arg7[%c0_55, %c0_56] : memref<8x128xf32, #tpu.memory_space<vmem>>, vector<8x128xf32>
    tpu.vector_store %arg7[%c0_55, %c0_56], %89 {strides = array<i32>} : memref<8x128xf32, #tpu.memory_space<vmem>>, vector<8x128xf32>,
    return
  }
  func.func @transform_0(%arg0: i32, %arg1: i32) -> (i32, i32, i32) {
    %c0_i32 = arith.constant 0 : i32
    %c0_i32_0 = arith.constant 0 : i32
    return %arg1, %arg0, %c0_i32 : i32, i32, i32
  }
  func.func @transform_1(%arg0: i32, %arg1: i32) -> (i32, i32) {
    %c0_i32 = arith.constant 0 : i32
    %c0_i32_0 = arith.constant 0 : i32
    %c0_i32_1 = arith.constant 0 : i32
    return %c0_i32, %c0_i32_0 : i32, i32
  }
  func.func @transform_2(%arg0: i32, %arg1: i32) -> (i32, i32) {
    %c0_i32 = arith.constant 0 : i32
    %c0_i32_0 = arith.constant 0 : i32
    %c0_i32_1 = arith.constant 0 : i32
    return %c0_i32, %c0_i32_0 : i32, i32
  }
  func.func @transform_3(%arg0: i32, %arg1: i32) -> (i32, i32) {
    %c0_i32 = arith.constant 0 : i32
    %c0_i32_0 = arith.constant 0 : i32
    %c0_i32_1 = arith.constant 0 : i32
    return %c0_i32, %c0_i32_0 : i32, i32
  }
  func.func @transform_4(%arg0: i32, %arg1: i32) -> (i32, i32, i32) {
    %c0_i32 = arith.constant 0 : i32
    %c0_i32_0 = arith.constant 0 : i32
    return %arg1, %arg0, %c0_i32 : i32, i32, i32
  }
}

</mosaic_0001>

<llo_original>
// kernel: var_masked_rnn_forward.2
$region0: #{var_masked_rnn_forward.2}
  #allocation0 [shape = 'u32[]', space=smem, size = 0x4, offset = 0x4, fixed_abs, tag = 'smem constant byte address 0x4 - core index']
  #allocation1 [shape = 'u32[144,128]{1,0:T(1,128)}', space=vmem, size = 0x12000, scoped, tag = 'internal scratch']
  #allocation2 [shape = 'f32[8,128]{1,0:T(8,128)}', space=vmem, size = 0x1000, scoped, tag = 'scratch operand']
  #allocation3 [shape = 'f32[8,8,128]{2,1,0:T(8,128)}', space=vmem, size = 0x8000, scoped, tag = 'scratch operand']
  %s0 = inlined_call_operand.vmem [shape: f32[8,8,128], index: 0, kind: input, shape index: {}]
  %s1 = inlined_call_operand.vmem [shape: f32[128,128], index: 1, kind: input, shape index: {}]
  %s2 = inlined_call_operand.vmem [shape: f32[1,128], index: 2, kind: input, shape index: {}]
  %s3 = inlined_call_operand.vmem [shape: f32[128,128], index: 3, kind: input, shape index: {}]
  %s4 = inlined_call_operand.vmem [shape: f32[8,8,128], index: 4, kind: output, shape index: {}]
  %s5 = sld [smem:[#allocation0]]
  $region30: #{var_masked_rnn_forward.2} parent=0
    _
  %s7 = ssub.s32 1, %s5
  %s8 = scalar_select 0, %s7, %s5
  // Predicated region
  $region2: #{var_masked_rnn_forward.2} parent=0 // pred_check
    _
  $region3: #{var_masked_rnn_forward.2} parent=0 // pred_check_branch
    %10 = sbr.rel (0) target = $region5
  $region4: #{var_masked_rnn_forward.2} parent=0 // pred_region
    _
  $region5: #{var_masked_rnn_forward.2} parent=0 // pred_fallthru
    _
  // Predicated region
  $region6: #{var_masked_rnn_forward.2} parent=0 // pred_check
    _
  $region7: #{var_masked_rnn_forward.2} parent=0 // pred_check_branch
    %12 = sbr.rel (0) target = $region9
  $region8: #{var_masked_rnn_forward.2} parent=0 // pred_region
    _
  $region9: #{var_masked_rnn_forward.2} parent=0 // pred_fallthru
    _
  // Predicated region
  $region10: #{var_masked_rnn_forward.2} parent=0 // pred_check
    _
  $region11: #{var_masked_rnn_forward.2} parent=0 // pred_check_branch
    %14 = sbr.rel (0) target = $region13
  $region12: #{var_masked_rnn_forward.2} parent=0 // pred_region
    _
  $region13: #{var_masked_rnn_forward.2} parent=0 // pred_fallthru
    _
  // Predicated region
  $region14: #{var_masked_rnn_forward.2} parent=0 // pred_check
    _
  $region15: #{var_masked_rnn_forward.2} parent=0 // pred_check_branch
    %16 = sbr.rel (0) target = $region17
  $region16: #{var_masked_rnn_forward.2} parent=0 // pred_region
    _
  $region17: #{var_masked_rnn_forward.2} parent=0 // pred_fallthru
    _
  %p17 = scmp.eq.s32.totalorder 0, 0
  // Predicated region
  $region18: #{var_masked_rnn_forward.2} parent=0 // pred_check
    %p18 = pneg %p17
  $region19: #{var_masked_rnn_forward.2} parent=0 // pred_check_branch
    %20 = sbr.rel (%p18) target = $region21
  $region20: #{var_masked_rnn_forward.2} parent=0 // pred_region
    %21 = vst [vmem:[#allocation2] sm:$0xff] 0.0
  $region21: #{var_masked_rnn_forward.2} parent=0 // pred_fallthru
    _
  %v22 = vld [vmem:[%s0] sm:$0xff]
  %v23 = vld [vmem:[%s0 + $0x8] sm:$0xff]
  %v24 = vld [vmem:[%s0 + $0x10] sm:$0xff]
  %v25 = vld [vmem:[%s0 + $0x18] sm:$0xff]
  %v26 = vld [vmem:[%s0 + $0x20] sm:$0xff]
  %v27 = vld [vmem:[%s0 + $0x28] sm:$0xff]
  %v28 = vld [vmem:[%s0 + $0x30] sm:$0xff]
  %v29 = vld [vmem:[%s0 + $0x38] sm:$0xff]
  %v30 = vld [vmem:[%s1] sm:$0xff]
  %v31 = vld [vmem:[%s1 + $0x8] sm:$0xff]
  %v32 = vld [vmem:[%s1 + $0x10] sm:$0xff]
  %v33 = vld [vmem:[%s1 + $0x18] sm:$0xff]
  %v34 = vld [vmem:[%s1 + $0x20] sm:$0xff]
  %v35 = vld [vmem:[%s1 + $0x28] sm:$0xff]
  %v36 = vld [vmem:[%s1 + $0x30] sm:$0xff]
  %v37 = vld [vmem:[%s1 + $0x38] sm:$0xff]
  %v38 = vld [vmem:[%s1 + $0x40] sm:$0xff]
  %v39 = vld [vmem:[%s1 + $0x48] sm:$0xff]
  %v40 = vld [vmem:[%s1 + $0x50] sm:$0xff]
  %v41 = vld [vmem:[%s1 + $0x58] sm:$0xff]
  %v42 = vld [vmem:[%s1 + $0x60] sm:$0xff]
  %v43 = vld [vmem:[%s1 + $0x68] sm:$0xff]
  %v44 = vld [vmem:[%s1 + $0x70] sm:$0xff]
  %v45 = vld [vmem:[%s1 + $0x78] sm:$0xff]
  %v46 = vld [vmem:[%s2] sm:$0x1]
  %v48 = vlaneseq
  %v49 = vshrl.u32 %v48, 7
  %v50 = vsub.s32 0, %v49
  %v51 = vrot.slane %v46, %v50
  %53 = vmatprep.subr.mxu0 0.0
  %54 = vmatpush1.msra.mxu0 %v30
  %55 = vmatprep.subr.mxu0 0.0
  %56 = vmatpush1.msra.mxu0 %v31
  %57 = vmatprep.subr.mxu0 0.0
  %58 = vmatpush1.msra.mxu0 %v32
  %59 = vmatprep.subr.mxu0 0.0
  %60 = vmatpush1.msra.mxu0 %v33
  %61 = vmatprep.subr.mxu0 0.0
  %62 = vmatpush1.msra.mxu0 %v34
  %63 = vmatprep.subr.mxu0 0.0
  %64 = vmatpush1.msra.mxu0 %v35
  %65 = vmatprep.subr.mxu0 0.0
  %66 = vmatpush1.msra.mxu0 %v36
  %67 = vmatprep.subr.mxu0 0.0
  %68 = vmatpush1.msra.mxu0 %v37
  %69 = vmatprep.subr.mxu0 0.0
  %70 = vmatpush1.msra.mxu0 %v38
  %71 = vmatprep.subr.mxu0 0.0
  %72 = vmatpush1.msra.mxu0 %v39
  %73 = vmatprep.subr.mxu0 0.0
  %74 = vmatpush1.msra.mxu0 %v40
  %75 = vmatprep.subr.mxu0 0.0
  %76 = vmatpush1.msra.mxu0 %v41
  %77 = vmatprep.subr.mxu0 0.0
  %78 = vmatpush1.msra.mxu0 %v42
  %79 = vmatprep.subr.mxu0 0.0
  %80 = vmatpush1.msra.mxu0 %v43
  %81 = vmatprep.subr.mxu0 0.0
  %82 = vmatpush1.msra.mxu0 %v44
  %83 = vmatprep.subr.mxu0 0.0
  %84 = vmatpush1.msra.mxu0 %v45
  %85 = vmatprep.subr.mxu0 0.0
  %86 = vmatpush1.msra.mxu0 0.0
  %87 = vmatprep.subr.mxu0 0.0
  %88 = vmatpush1.msra.mxu0 0.0
  %89 = vmatprep.subr.mxu0 0.0
  %90 = vmatpush1.msra.mxu0 0.0
  %91 = vmatprep.subr.mxu0 0.0
  %92 = vmatpush1.msra.mxu0 0.0
  %93 = vmatprep.subr.mxu0 0.0
  %94 = vmatpush1.msra.mxu0 0.0
  %95 = vmatprep.subr.mxu0 0.0
  %96 = vmatpush1.msra.mxu0 0.0
  %97 = vmatprep.subr.mxu0 0.0
  %98 = vmatpush1.msra.mxu0 0.0
  %99 = vmatprep.subr.mxu0 0.0
  %100 = vmatpush1.msra.mxu0 0.0
  %101 = vmatprep.subr.mxu0 0.0
  %102 = vmatpush1.msra.mxu0 0.0
  %103 = vmatprep.subr.mxu0 0.0
  %104 = vmatpush1.msra.mxu0 0.0
  %105 = vmatprep.subr.mxu0 0.0
  %106 = vmatpush1.msra.mxu0 0.0
  %107 = vmatprep.subr.mxu0 0.0
  %108 = vmatpush1.msra.mxu0 0.0
  %109 = vmatprep.subr.mxu0 0.0
  %110 = vmatpush1.msra.mxu0 0.0
  %111 = vmatprep.subr.mxu0 0.0
  %112 = vmatpush1.msra.mxu0 0.0
  %113 = vmatprep.subr.mxu0 0.0
  %114 = vmatpush1.msra.mxu0 0.0
  %115 = vmatprep.subr.mxu0 0.0
  %116 = vmatpush1.msra.mxu0 0.0
  %117 = vmatprep.mubr.f32.mxu0 0.0
  %118 = vmatmul.mubr.f32.gmra.mrb[0].mxu0 %v22
  %v119 = vpop.f32.mrb[0].mxu0
  %v120 = vadd.f32 %v51, %v119
  %v121 = vpop.f32.mrb[0].mxu0
  %122 = vmatprep.mubr.f32.mxu0 0.0
  %123 = vmatmul.mubr.f32.gmra.mrb[0].mxu0 %v23
  %v124 = vpop.f32.mrb[0].mxu0
  %v125 = vadd.f32 %v51, %v124
  %v126 = vpop.f32.mrb[0].mxu0
  %127 = vmatprep.mubr.f32.mxu0 0.0
  %128 = vmatmul.mubr.f32.gmra.mrb[0].mxu0 %v24
  %v129 = vpop.f32.mrb[0].mxu0
  %v130 = vadd.f32 %v51, %v129
  %v131 = vpop.f32.mrb[0].mxu0
  %132 = vmatprep.mubr.f32.mxu0 0.0
  %133 = vmatmul.mubr.f32.gmra.mrb[0].mxu0 %v25
  %v134 = vpop.f32.mrb[0].mxu0
  %v135 = vadd.f32 %v51, %v134
  %v136 = vpop.f32.mrb[0].mxu0
  %137 = vmatprep.mubr.f32.mxu0 0.0
  %138 = vmatmul.mubr.f32.gmra.mrb[0].mxu0 %v26
  %v139 = vpop.f32.mrb[0].mxu0
  %v140 = vadd.f32 %v51, %v139
  %v141 = vpop.f32.mrb[0].mxu0
  %142 = vmatprep.mubr.f32.mxu0 0.0
  %143 = vmatmul.mubr.f32.gmra.mrb[0].mxu0 %v27
  %v144 = vpop.f32.mrb[0].mxu0
  %v145 = vadd.f32 %v51, %v144
  %v146 = vpop.f32.mrb[0].mxu0
  %147 = vmatprep.mubr.f32.mxu0 0.0
  %148 = vmatmul.mubr.f32.gmra.mrb[0].mxu0 %v28
  %v149 = vpop.f32.mrb[0].mxu0
  %v150 = vadd.f32 %v51, %v149
  %v151 = vpop.f32.mrb[0].mxu0
  %152 = vmatprep.mubr.f32.mxu0 0.0
  %153 = vmatmul.mubr.f32.gmra.mrb[0].mxu0 %v29
  %v154 = vpop.f32.mrb[0].mxu0
  %v155 = vadd.f32 %v51, %v154
  %v156 = vpop.f32.mrb[0].mxu0
  %157 = vdwg.mxu0
  %158 = vst [vmem:[#allocation3] sm:$0xff] %v120
  %159 = vst [vmem:[#allocation3 + $0x8] sm:$0xff] %v125
  %160 = vst [vmem:[#allocation3 + $0x10] sm:$0xff] %v130
  %161 = vst [vmem:[#allocation3 + $0x18] sm:$0xff] %v135
  %162 = vst [vmem:[#allocation3 + $0x20] sm:$0xff] %v140
  %163 = vst [vmem:[#allocation3 + $0x28] sm:$0xff] %v145
  %164 = vst [vmem:[#allocation3 + $0x30] sm:$0xff] %v150
  %165 = vst [vmem:[#allocation3 + $0x38] sm:$0xff] %v155
  %v166 = vld [vmem:[%s3] sm:$0xff]
  %v167 = vld [vmem:[%s3 + $0x8] sm:$0xff]
  %v168 = vld [vmem:[%s3 + $0x10] sm:$0xff]
  %v169 = vld [vmem:[%s3 + $0x18] sm:$0xff]
  %v170 = vld [vmem:[%s3 + $0x20] sm:$0xff]
  %v171 = vld [vmem:[%s3 + $0x28] sm:$0xff]
  %v172 = vld [vmem:[%s3 + $0x30] sm:$0xff]
  %v173 = vld [vmem:[%s3 + $0x38] sm:$0xff]
  %v174 = vld [vmem:[%s3 + $0x40] sm:$0xff]
  %v175 = vld [vmem:[%s3 + $0x48] sm:$0xff]
  %v176 = vld [vmem:[%s3 + $0x50] sm:$0xff]
  %v177 = vld [vmem:[%s3 + $0x58] sm:$0xff]
  %v178 = vld [vmem:[%s3 + $0x60] sm:$0xff]
  %v179 = vld [vmem:[%s3 + $0x68] sm:$0xff]
  %v180 = vld [vmem:[%s3 + $0x70] sm:$0xff]
  %v181 = vld [vmem:[%s3 + $0x78] sm:$0xff]
  %v182 = vld [vmem:[#allocation2] sm:$0xff]
  %v183 = vld [vmem:[#allocation3] sm:$0xff]
  %184 = vmatprep.subr.mxu0 0.0
  %185 = vmatpush1.msra.mxu0 %v166
  %186 = vmatprep.subr.mxu0 0.0
  %187 = vmatpush1.msra.mxu0 %v167
  %188 = vmatprep.subr.mxu0 0.0
  %189 = vmatpush1.msra.mxu0 %v168
  %190 = vmatprep.subr.mxu0 0.0
  %191 = vmatpush1.msra.mxu0 %v169
  %192 = vmatprep.subr.mxu0 0.0
  %193 = vmatpush1.msra.mxu0 %v170
  %194 = vmatprep.subr.mxu0 0.0
  %195 = vmatpush1.msra.mxu0 %v171
  %196 = vmatprep.subr.mxu0 0.0
  %197 = vmatpush1.msra.mxu0 %v172
  %198 = vmatprep.subr.mxu0 0.0
  %199 = vmatpush1.msra.mxu0 %v173
  %200 = vmatprep.subr.mxu0 0.0
  %201 = vmatpush1.msra.mxu0 %v174
  %202 = vmatprep.subr.mxu0 0.0
  %203 = vmatpush1.msra.mxu0 %v175
  %204 = vmatprep.subr.mxu0 0.0
  %205 = vmatpush1.msra.mxu0 %v176
  %206 = vmatprep.subr.mxu0 0.0
  %207 = vmatpush1.msra.mxu0 %v177
  %208 = vmatprep.subr.mxu0 0.0
  %209 = vmatpush1.msra.mxu0 %v178
  %210 = vmatprep.subr.mxu0 0.0
  %211 = vmatpush1.msra.mxu0 %v179
  %212 = vmatprep.subr.mxu0 0.0
  %213 = vmatpush1.msra.mxu0 %v180
  %214 = vmatprep.subr.mxu0 0.0
  %215 = vmatpush1.msra.mxu0 %v181
  %216 = vmatprep.subr.mxu0 0.0
  %217 = vmatpush1.msra.mxu0 0.0
  %218 = vmatprep.subr.mxu0 0.0
  %219 = vmatpush1.msra.mxu0 0.0
  %220 = vmatprep.subr.mxu0 0.0
  %221 = vmatpush1.msra.mxu0 0.0
  %222 = vmatprep.subr.mxu0 0.0
  %223 = vmatpush1.msra.mxu0 0.0
  %224 = vmatprep.subr.mxu0 0.0
  %225 = vmatpush1.msra.mxu0 0.0
  %226 = vmatprep.subr.mxu0 0.0
  %227 = vmatpush1.msra.mxu0 0.0
  %228 = vmatprep.subr.mxu0 0.0
  %229 = vmatpush1.msra.mxu0 0.0
  %230 = vmatprep.subr.mxu0 0.0
  %231 = vmatpush1.msra.mxu0 0.0
  %232 = vmatprep.subr.mxu0 0.0
  %233 = vmatpush1.msra.mxu0 0.0
  %234 = vmatprep.subr.mxu0 0.0
  %235 = vmatpush1.msra.mxu0 0.0
  %236 = vmatprep.subr.mxu0 0.0
  %237 = vmatpush1.msra.mxu0 0.0
  %238 = vmatprep.subr.mxu0 0.0
  %239 = vmatpush1.msra.mxu0 0.0
  %240 = vmatprep.subr.mxu0 0.0
  %241 = vmatpush1.msra.mxu0 0.0
  %242 = vmatprep.subr.mxu0 0.0
  %243 = vmatpush1.msra.mxu0 0.0
  %244 = vmatprep.subr.mxu0 0.0
  %245 = vmatpush1.msra.mxu0 0.0
  %246 = vmatprep.subr.mxu0 0.0
  %247 = vmatpush1.msra.mxu0 0.0
  %248 = vmatprep.mubr.f32.mxu0 0.0
  %249 = vmatmul.mubr.f32.gmra.mrb[0].mxu0 %v182
  %v250 = vpop.f32.mrb[0].mxu0
  %v251 = vadd.f32 0.0, %v250
  %v252 = vpop.f32.mrb[0].mxu0
  %253 = vdwg.mxu0
  %v254 = vadd.f32 %v183, %v251
  %v255 = vtanh.pop %v254
  %256 = vst [vmem:[%s4] sm:$0xff] %v255
  %s257 = scalar_lea.vmem [#allocation3], 8
  %v258 = vld [vmem:[%s257] sm:$0xff]
  %259 = vmatprep.subr.mxu0 0.0
  %260 = vmatpush1.msra.mxu0 %v166
  %261 = vmatprep.subr.mxu0 0.0
  %262 = vmatpush1.msra.mxu0 %v167
  %263 = vmatprep.subr.mxu0 0.0
  %264 = vmatpush1.msra.mxu0 %v168
  %265 = vmatprep.subr.mxu0 0.0
  %266 = vmatpush1.msra.mxu0 %v169
  %267 = vmatprep.subr.mxu0 0.0
  %268 = vmatpush1.msra.mxu0 %v170
  %269 = vmatprep.subr.mxu0 0.0
  %270 = vmatpush1.msra.mxu0 %v171
  %271 = vmatprep.subr.mxu0 0.0
  %272 = vmatpush1.msra.mxu0 %v172
  %273 = vmatprep.subr.mxu0 0.0
  %274 = vmatpush1.msra.mxu0 %v173
  %275 = vmatprep.subr.mxu0 0.0
  %276 = vmatpush1.msra.mxu0 %v174
  %277 = vmatprep.subr.mxu0 0.0
  %278 = vmatpush1.msra.mxu0 %v175
  %279 = vmatprep.subr.mxu0 0.0
  %280 = vmatpush1.msra.mxu0 %v176
  %281 = vmatprep.subr.mxu0 0.0
  %282 = vmatpush1.msra.mxu0 %v177
  %283 = vmatprep.subr.mxu0 0.0
  %284 = vmatpush1.msra.mxu0 %v178
  %285 = vmatprep.subr.mxu0 0.0
  %286 = vmatpush1.msra.mxu0 %v179
  %287 = vmatprep.subr.mxu0 0.0
  %288 = vmatpush1.msra.mxu0 %v180
  %289 = vmatprep.subr.mxu0 0.0
  %290 = vmatpush1.msra.mxu0 %v181
  %291 = vmatprep.subr.mxu0 0.0
  %292 = vmatpush1.msra.mxu0 0.0
  %293 = vmatprep.subr.mxu0 0.0
  %294 = vmatpush1.msra.mxu0 0.0
  %295 = vmatprep.subr.mxu0 0.0
  %296 = vmatpush1.msra.mxu0 0.0
  %297 = vmatprep.subr.mxu0 0.0
  %298 = vmatpush1.msra.mxu0 0.0
  %299 = vmatprep.subr.mxu0 0.0
  %300 = vmatpush1.msra.mxu0 0.0
  %301 = vmatprep.subr.mxu0 0.0
  %302 = vmatpush1.msra.mxu0 0.0
  %303 = vmatprep.subr.mxu0 0.0
  %304 = vmatpush1.msra.mxu0 0.0
  %305 = vmatprep.subr.mxu0 0.0
  %306 = vmatpush1.msra.mxu0 0.0
  %307 = vmatprep.subr.mxu0 0.0
  %308 = vmatpush1.msra.mxu0 0.0
  %309 = vmatprep.subr.mxu0 0.0
  %310 = vmatpush1.msra.mxu0 0.0
  %311 = vmatprep.subr.mxu0 0.0
  %312 = vmatpush1.msra.mxu0 0.0
  %313 = vmatprep.subr.mxu0 0.0
  %314 = vmatpush1.msra.mxu0 0.0
  %315 = vmatprep.subr.mxu0 0.0
  %316 = vmatpush1.msra.mxu0 0.0
  %317 = vmatprep.subr.mxu0 0.0
  %318 = vmatpush1.msra.mxu0 0.0
  %319 = vmatprep.subr.mxu0 0.0
  %320 = vmatpush1.msra.mxu0 0.0
  %321 = vmatprep.subr.mxu0 0.0
  %322 = vmatpush1.msra.mxu0 0.0
  %323 = vmatprep.mubr.f32.mxu0 0.0
  %324 = vmatmul.mubr.f32.gmra.mrb[0].mxu0 %v255
  %v325 = vpop.f32.mrb[0].mxu0
  %v326 = vadd.f32 0.0, %v325
  %v327 = vpop.f32.mrb[0].mxu0
  %328 = vdwg.mxu0
  %v329 = vadd.f32 %v258, %v326
  %v330 = vtanh.pop %v329
  %s331 = scalar_lea.vmem %s4, 8
  %332 = vst [vmem:[%s331] sm:$0xff] %v330
  %s333 = scalar_lea.vmem [#allocation3], 16
  %v334 = vld [vmem:[%s333] sm:$0xff]
  %335 = vmatprep.subr.mxu0 0.0
  %336 = vmatpush1.msra.mxu0 %v166
  %337 = vmatprep.subr.mxu0 0.0
  %338 = vmatpush1.msra.mxu0 %v167
  %339 = vmatprep.subr.mxu0 0.0
  %340 = vmatpush1.msra.mxu0 %v168
  %341 = vmatprep.subr.mxu0 0.0
  %342 = vmatpush1.msra.mxu0 %v169
  %343 = vmatprep.subr.mxu0 0.0
  %344 = vmatpush1.msra.mxu0 %v170
  %345 = vmatprep.subr.mxu0 0.0
  %346 = vmatpush1.msra.mxu0 %v171
  %347 = vmatprep.subr.mxu0 0.0
  %348 = vmatpush1.msra.mxu0 %v172
  %349 = vmatprep.subr.mxu0 0.0
  %350 = vmatpush1.msra.mxu0 %v173
  %351 = vmatprep.subr.mxu0 0.0
  %352 = vmatpush1.msra.mxu0 %v174
  %353 = vmatprep.subr.mxu0 0.0
  %354 = vmatpush1.msra.mxu0 %v175
  %355 = vmatprep.subr.mxu0 0.0
  %356 = vmatpush1.msra.mxu0 %v176
  %357 = vmatprep.subr.mxu0 0.0
  %358 = vmatpush1.msra.mxu0 %v177
  %359 = vmatprep.subr.mxu0 0.0
  %360 = vmatpush1.msra.mxu0 %v178
  %361 = vmatprep.subr.mxu0 0.0
  %362 = vmatpush1.msra.mxu0 %v179
  %363 = vmatprep.subr.mxu0 0.0
  %364 = vmatpush1.msra.mxu0 %v180
  %365 = vmatprep.subr.mxu0 0.0
  %366 = vmatpush1.msra.mxu0 %v181
  %367 = vmatprep.subr.mxu0 0.0
  %368 = vmatpush1.msra.mxu0 0.0
  %369 = vmatprep.subr.mxu0 0.0
  %370 = vmatpush1.msra.mxu0 0.0
  %371 = vmatprep.subr.mxu0 0.0
  %372 = vmatpush1.msra.mxu0 0.0
  %373 = vmatprep.subr.mxu0 0.0
  %374 = vmatpush1.msra.mxu0 0.0
  %375 = vmatprep.subr.mxu0 0.0
  %376 = vmatpush1.msra.mxu0 0.0
  %377 = vmatprep.subr.mxu0 0.0
  %378 = vmatpush1.msra.mxu0 0.0
  %379 = vmatprep.subr.mxu0 0.0
  %380 = vmatpush1.msra.mxu0 0.0
  %381 = vmatprep.subr.mxu0 0.0
  %382 = vmatpush1.msra.mxu0 0.0
  %383 = vmatprep.subr.mxu0 0.0
  %384 = vmatpush1.msra.mxu0 0.0
  %385 = vmatprep.subr.mxu0 0.0
  %386 = vmatpush1.msra.mxu0 0.0
  %387 = vmatprep.subr.mxu0 0.0
  %388 = vmatpush1.msra.mxu0 0.0
  %389 = vmatprep.subr.mxu0 0.0
  %390 = vmatpush1.msra.mxu0 0.0
  %391 = vmatprep.subr.mxu0 0.0
  %392 = vmatpush1.msra.mxu0 0.0
  %393 = vmatprep.subr.mxu0 0.0
  %394 = vmatpush1.msra.mxu0 0.0
  %395 = vmatprep.subr.mxu0 0.0
  %396 = vmatpush1.msra.mxu0 0.0
  %397 = vmatprep.subr.mxu0 0.0
  %398 = vmatpush1.msra.mxu0 0.0
  %399 = vmatprep.mubr.f32.mxu0 0.0
  %400 = vmatmul.mubr.f32.gmra.mrb[0].mxu0 %v330
  %v401 = vpop.f32.mrb[0].mxu0
  %v402 = vadd.f32 0.0, %v401
  %v403 = vpop.f32.mrb[0].mxu0
  %404 = vdwg.mxu0
  %v405 = vadd.f32 %v334, %v402
  %v406 = vtanh.pop %v405
  %s407 = scalar_lea.vmem %s4, 16
  %408 = vst [vmem:[%s407] sm:$0xff] %v406
  %s409 = scalar_lea.vmem [#allocation3], 24
  %v410 = vld [vmem:[%s409] sm:$0xff]
  %411 = vmatprep.subr.mxu0 0.0
  %412 = vmatpush1.msra.mxu0 %v166
  %413 = vmatprep.subr.mxu0 0.0
  %414 = vmatpush1.msra.mxu0 %v167
  %415 = vmatprep.subr.mxu0 0.0
  %416 = vmatpush1.msra.mxu0 %v168
  %417 = vmatprep.subr.mxu0 0.0
  %418 = vmatpush1.msra.mxu0 %v169
  %419 = vmatprep.subr.mxu0 0.0
  %420 = vmatpush1.msra.mxu0 %v170
  %421 = vmatprep.subr.mxu0 0.0
  %422 = vmatpush1.msra.mxu0 %v171
  %423 = vmatprep.subr.mxu0 0.0
  %424 = vmatpush1.msra.mxu0 %v172
  %425 = vmatprep.subr.mxu0 0.0
  %426 = vmatpush1.msra.mxu0 %v173
  %427 = vmatprep.subr.mxu0 0.0
  %428 = vmatpush1.msra.mxu0 %v174
  %429 = vmatprep.subr.mxu0 0.0
  %430 = vmatpush1.msra.mxu0 %v175
  %431 = vmatprep.subr.mxu0 0.0
  %432 = vmatpush1.msra.mxu0 %v176
  %433 = vmatprep.subr.mxu0 0.0
  %434 = vmatpush1.msra.mxu0 %v177
  %435 = vmatprep.subr.mxu0 0.0
  %436 = vmatpush1.msra.mxu0 %v178
  %437 = vmatprep.subr.mxu0 0.0
  %438 = vmatpush1.msra.mxu0 %v179
  %439 = vmatprep.subr.mxu0 0.0
  %440 = vmatpush1.msra.mxu0 %v180
  %441 = vmatprep.subr.mxu0 0.0
  %442 = vmatpush1.msra.mxu0 %v181
  %443 = vmatprep.subr.mxu0 0.0
  %444 = vmatpush1.msra.mxu0 0.0
  %445 = vmatprep.subr.mxu0 0.0
  %446 = vmatpush1.msra.mxu0 0.0
  %447 = vmatprep.subr.mxu0 0.0
  %448 = vmatpush1.msra.mxu0 0.0
  %449 = vmatprep.subr.mxu0 0.0
  %450 = vmatpush1.msra.mxu0 0.0
  %451 = vmatprep.subr.mxu0 0.0
  %452 = vmatpush1.msra.mxu0 0.0
  %453 = vmatprep.subr.mxu0 0.0
  %454 = vmatpush1.msra.mxu0 0.0
  %455 = vmatprep.subr.mxu0 0.0
  %456 = vmatpush1.msra.mxu0 0.0
  %457 = vmatprep.subr.mxu0 0.0
  %458 = vmatpush1.msra.mxu0 0.0
  %459 = vmatprep.subr.mxu0 0.0
  %460 = vmatpush1.msra.mxu0 0.0
  %461 = vmatprep.subr.mxu0 0.0
  %462 = vmatpush1.msra.mxu0 0.0
  %463 = vmatprep.subr.mxu0 0.0
  %464 = vmatpush1.msra.mxu0 0.0
  %465 = vmatprep.subr.mxu0 0.0
  %466 = vmatpush1.msra.mxu0 0.0
  %467 = vmatprep.subr.mxu0 0.0
  %468 = vmatpush1.msra.mxu0 0.0
  %469 = vmatprep.subr.mxu0 0.0
  %470 = vmatpush1.msra.mxu0 0.0
  %471 = vmatprep.subr.mxu0 0.0
  %472 = vmatpush1.msra.mxu0 0.0
  %473 = vmatprep.subr.mxu0 0.0
  %474 = vmatpush1.msra.mxu0 0.0
  %475 = vmatprep.mubr.f32.mxu0 0.0
  %476 = vmatmul.mubr.f32.gmra.mrb[0].mxu0 %v406
  %v477 = vpop.f32.mrb[0].mxu0
  %v478 = vadd.f32 0.0, %v477
  %v479 = vpop.f32.mrb[0].mxu0
  %480 = vdwg.mxu0
  %v481 = vadd.f32 %v410, %v478
  %v482 = vtanh.pop %v481
  %s483 = scalar_lea.vmem %s4, 24
  %484 = vst [vmem:[%s483] sm:$0xff] %v482
  %s485 = scalar_lea.vmem [#allocation3], 32
  %v486 = vld [vmem:[%s485] sm:$0xff]
  %487 = vmatprep.subr.mxu0 0.0
  %488 = vmatpush1.msra.mxu0 %v166
  %489 = vmatprep.subr.mxu0 0.0
  %490 = vmatpush1.msra.mxu0 %v167
  %491 = vmatprep.subr.mxu0 0.0
  %492 = vmatpush1.msra.mxu0 %v168
  %493 = vmatprep.subr.mxu0 0.0
  %494 = vmatpush1.msra.mxu0 %v169
  %495 = vmatprep.subr.mxu0 0.0
  %496 = vmatpush1.msra.mxu0 %v170
  %497 = vmatprep.subr.mxu0 0.0
  %498 = vmatpush1.msra.mxu0 %v171
  %499 = vmatprep.subr.mxu0 0.0
  %500 = vmatpush1.msra.mxu0 %v172
  %501 = vmatprep.subr.mxu0 0.0
  %502 = vmatpush1.msra.mxu0 %v173
  %503 = vmatprep.subr.mxu0 0.0
  %504 = vmatpush1.msra.mxu0 %v174
  %505 = vmatprep.subr.mxu0 0.0
  %506 = vmatpush1.msra.mxu0 %v175
  %507 = vmatprep.subr.mxu0 0.0
  %508 = vmatpush1.msra.mxu0 %v176
  %509 = vmatprep.subr.mxu0 0.0
  %510 = vmatpush1.msra.mxu0 %v177
  %511 = vmatprep.subr.mxu0 0.0
  %512 = vmatpush1.msra.mxu0 %v178
  %513 = vmatprep.subr.mxu0 0.0
  %514 = vmatpush1.msra.mxu0 %v179
  %515 = vmatprep.subr.mxu0 0.0
  %516 = vmatpush1.msra.mxu0 %v180
  %517 = vmatprep.subr.mxu0 0.0
  %518 = vmatpush1.msra.mxu0 %v181
  %519 = vmatprep.subr.mxu0 0.0
  %520 = vmatpush1.msra.mxu0 0.0
  %521 = vmatprep.subr.mxu0 0.0
  %522 = vmatpush1.msra.mxu0 0.0
  %523 = vmatprep.subr.mxu0 0.0
  %524 = vmatpush1.msra.mxu0 0.0
  %525 = vmatprep.subr.mxu0 0.0
  %526 = vmatpush1.msra.mxu0 0.0
  %527 = vmatprep.subr.mxu0 0.0
  %528 = vmatpush1.msra.mxu0 0.0
  %529 = vmatprep.subr.mxu0 0.0
  %530 = vmatpush1.msra.mxu0 0.0
  %531 = vmatprep.subr.mxu0 0.0
  %532 = vmatpush1.msra.mxu0 0.0
  %533 = vmatprep.subr.mxu0 0.0
  %534 = vmatpush1.msra.mxu0 0.0
  %535 = vmatprep.subr.mxu0 0.0
  %536 = vmatpush1.msra.mxu0 0.0
  %537 = vmatprep.subr.mxu0 0.0
  %538 = vmatpush1.msra.mxu0 0.0
  %539 = vmatprep.subr.mxu0 0.0
  %540 = vmatpush1.msra.mxu0 0.0
  %541 = vmatprep.subr.mxu0 0.0
  %542 = vmatpush1.msra.mxu0 0.0
  %543 = vmatprep.subr.mxu0 0.0
  %544 = vmatpush1.msra.mxu0 0.0
  %545 = vmatprep.subr.mxu0 0.0
  %546 = vmatpush1.msra.mxu0 0.0
  %547 = vmatprep.subr.mxu0 0.0
  %548 = vmatpush1.msra.mxu0 0.0
  %549 = vmatprep.subr.mxu0 0.0
  %550 = vmatpush1.msra.mxu0 0.0
  %551 = vmatprep.mubr.f32.mxu0 0.0
  %552 = vmatmul.mubr.f32.gmra.mrb[0].mxu0 %v482
  %v553 = vpop.f32.mrb[0].mxu0
  %v554 = vadd.f32 0.0, %v553
  %v555 = vpop.f32.mrb[0].mxu0
  %556 = vdwg.mxu0
  %v557 = vadd.f32 %v486, %v554
  %v558 = vtanh.pop %v557
  %s559 = scalar_lea.vmem %s4, 32
  %560 = vst [vmem:[%s559] sm:$0xff] %v558
  %s561 = scalar_lea.vmem [#allocation3], 40
  %v562 = vld [vmem:[%s561] sm:$0xff]
  %563 = vmatprep.subr.mxu0 0.0
  %564 = vmatpush1.msra.mxu0 %v166
  %565 = vmatprep.subr.mxu0 0.0
  %566 = vmatpush1.msra.mxu0 %v167
  %567 = vmatprep.subr.mxu0 0.0
  %568 = vmatpush1.msra.mxu0 %v168
  %569 = vmatprep.subr.mxu0 0.0
  %570 = vmatpush1.msra.mxu0 %v169
  %571 = vmatprep.subr.mxu0 0.0
  %572 = vmatpush1.msra.mxu0 %v170
  %573 = vmatprep.subr.mxu0 0.0
  %574 = vmatpush1.msra.mxu0 %v171
  %575 = vmatprep.subr.mxu0 0.0
  %576 = vmatpush1.msra.mxu0 %v172
  %577 = vmatprep.subr.mxu0 0.0
  %578 = vmatpush1.msra.mxu0 %v173
  %579 = vmatprep.subr.mxu0 0.0
  %580 = vmatpush1.msra.mxu0 %v174
  %581 = vmatprep.subr.mxu0 0.0
  %582 = vmatpush1.msra.mxu0 %v175
  %583 = vmatprep.subr.mxu0 0.0
  %584 = vmatpush1.msra.mxu0 %v176
  %585 = vmatprep.subr.mxu0 0.0
  %586 = vmatpush1.msra.mxu0 %v177
  %587 = vmatprep.subr.mxu0 0.0
  %588 = vmatpush1.msra.mxu0 %v178
  %589 = vmatprep.subr.mxu0 0.0
  %590 = vmatpush1.msra.mxu0 %v179
  %591 = vmatprep.subr.mxu0 0.0
  %592 = vmatpush1.msra.mxu0 %v180
  %593 = vmatprep.subr.mxu0 0.0
  %594 = vmatpush1.msra.mxu0 %v181
  %595 = vmatprep.subr.mxu0 0.0
  %596 = vmatpush1.msra.mxu0 0.0
  %597 = vmatprep.subr.mxu0 0.0
  %598 = vmatpush1.msra.mxu0 0.0
  %599 = vmatprep.subr.mxu0 0.0
  %600 = vmatpush1.msra.mxu0 0.0
  %601 = vmatprep.subr.mxu0 0.0
  %602 = vmatpush1.msra.mxu0 0.0
  %603 = vmatprep.subr.mxu0 0.0
  %604 = vmatpush1.msra.mxu0 0.0
  %605 = vmatprep.subr.mxu0 0.0
  %606 = vmatpush1.msra.mxu0 0.0
  %607 = vmatprep.subr.mxu0 0.0
  %608 = vmatpush1.msra.mxu0 0.0
  %609 = vmatprep.subr.mxu0 0.0
  %610 = vmatpush1.msra.mxu0 0.0
  %611 = vmatprep.subr.mxu0 0.0
  %612 = vmatpush1.msra.mxu0 0.0
  %613 = vmatprep.subr.mxu0 0.0
  %614 = vmatpush1.msra.mxu0 0.0
  %615 = vmatprep.subr.mxu0 0.0
  %616 = vmatpush1.msra.mxu0 0.0
  %617 = vmatprep.subr.mxu0 0.0
  %618 = vmatpush1.msra.mxu0 0.0
  %619 = vmatprep.subr.mxu0 0.0
  %620 = vmatpush1.msra.mxu0 0.0
  %621 = vmatprep.subr.mxu0 0.0
  %622 = vmatpush1.msra.mxu0 0.0
  %623 = vmatprep.subr.mxu0 0.0
  %624 = vmatpush1.msra.mxu0 0.0
  %625 = vmatprep.subr.mxu0 0.0
  %626 = vmatpush1.msra.mxu0 0.0
  %627 = vmatprep.mubr.f32.mxu0 0.0
  %628 = vmatmul.mubr.f32.gmra.mrb[0].mxu0 %v558
  %v629 = vpop.f32.mrb[0].mxu0
  %v630 = vadd.f32 0.0, %v629
  %v631 = vpop.f32.mrb[0].mxu0
  %632 = vdwg.mxu0
  %v633 = vadd.f32 %v562, %v630
  %v634 = vtanh.pop %v633
  %s635 = scalar_lea.vmem %s4, 40
  %636 = vst [vmem:[%s635] sm:$0xff] %v634
  %s637 = scalar_lea.vmem [#allocation3], 48
  %v638 = vld [vmem:[%s637] sm:$0xff]
  %639 = vmatprep.subr.mxu0 0.0
  %640 = vmatpush1.msra.mxu0 %v166
  %641 = vmatprep.subr.mxu0 0.0
  %642 = vmatpush1.msra.mxu0 %v167
  %643 = vmatprep.subr.mxu0 0.0
  %644 = vmatpush1.msra.mxu0 %v168
  %645 = vmatprep.subr.mxu0 0.0
  %646 = vmatpush1.msra.mxu0 %v169
  %647 = vmatprep.subr.mxu0 0.0
  %648 = vmatpush1.msra.mxu0 %v170
  %649 = vmatprep.subr.mxu0 0.0
  %650 = vmatpush1.msra.mxu0 %v171
  %651 = vmatprep.subr.mxu0 0.0
  %652 = vmatpush1.msra.mxu0 %v172
  %653 = vmatprep.subr.mxu0 0.0
  %654 = vmatpush1.msra.mxu0 %v173
  %655 = vmatprep.subr.mxu0 0.0
  %656 = vmatpush1.msra.mxu0 %v174
  %657 = vmatprep.subr.mxu0 0.0
  %658 = vmatpush1.msra.mxu0 %v175
  %659 = vmatprep.subr.mxu0 0.0
  %660 = vmatpush1.msra.mxu0 %v176
  %661 = vmatprep.subr.mxu0 0.0
  %662 = vmatpush1.msra.mxu0 %v177
  %663 = vmatprep.subr.mxu0 0.0
  %664 = vmatpush1.msra.mxu0 %v178
  %665 = vmatprep.subr.mxu0 0.0
  %666 = vmatpush1.msra.mxu0 %v179
  %667 = vmatprep.subr.mxu0 0.0
  %668 = vmatpush1.msra.mxu0 %v180
  %669 = vmatprep.subr.mxu0 0.0
  %670 = vmatpush1.msra.mxu0 %v181
  %671 = vmatprep.subr.mxu0 0.0
  %672 = vmatpush1.msra.mxu0 0.0
  %673 = vmatprep.subr.mxu0 0.0
  %674 = vmatpush1.msra.mxu0 0.0
  %675 = vmatprep.subr.mxu0 0.0
  %676 = vmatpush1.msra.mxu0 0.0
  %677 = vmatprep.subr.mxu0 0.0
  %678 = vmatpush1.msra.mxu0 0.0
  %679 = vmatprep.subr.mxu0 0.0
  %680 = vmatpush1.msra.mxu0 0.0
  %681 = vmatprep.subr.mxu0 0.0
  %682 = vmatpush1.msra.mxu0 0.0
  %683 = vmatprep.subr.mxu0 0.0
  %684 = vmatpush1.msra.mxu0 0.0
  %685 = vmatprep.subr.mxu0 0.0
  %686 = vmatpush1.msra.mxu0 0.0
  %687 = vmatprep.subr.mxu0 0.0
  %688 = vmatpush1.msra.mxu0 0.0
  %689 = vmatprep.subr.mxu0 0.0
  %690 = vmatpush1.msra.mxu0 0.0
  %691 = vmatprep.subr.mxu0 0.0
  %692 = vmatpush1.msra.mxu0 0.0
  %693 = vmatprep.subr.mxu0 0.0
  %694 = vmatpush1.msra.mxu0 0.0
  %695 = vmatprep.subr.mxu0 0.0
  %696 = vmatpush1.msra.mxu0 0.0
  %697 = vmatprep.subr.mxu0 0.0
  %698 = vmatpush1.msra.mxu0 0.0
  %699 = vmatprep.subr.mxu0 0.0
  %700 = vmatpush1.msra.mxu0 0.0
  %701 = vmatprep.subr.mxu0 0.0
  %702 = vmatpush1.msra.mxu0 0.0
  %703 = vmatprep.mubr.f32.mxu0 0.0
  %704 = vmatmul.mubr.f32.gmra.mrb[0].mxu0 %v634
  %v705 = vpop.f32.mrb[0].mxu0
  %v706 = vadd.f32 0.0, %v705
  %v707 = vpop.f32.mrb[0].mxu0
  %708 = vdwg.mxu0
  %v709 = vadd.f32 %v638, %v706
  %v710 = vtanh.pop %v709
  %s711 = scalar_lea.vmem %s4, 48
  %712 = vst [vmem:[%s711] sm:$0xff] %v710
  %s713 = scalar_lea.vmem [#allocation3], 56
  %v714 = vld [vmem:[%s713] sm:$0xff]
  %715 = vmatprep.subr.mxu0 0.0
  %716 = vmatpush1.msra.mxu0 %v166
  %717 = vmatprep.subr.mxu0 0.0
  %718 = vmatpush1.msra.mxu0 %v167
  %719 = vmatprep.subr.mxu0 0.0
  %720 = vmatpush1.msra.mxu0 %v168
  %721 = vmatprep.subr.mxu0 0.0
  %722 = vmatpush1.msra.mxu0 %v169
  %723 = vmatprep.subr.mxu0 0.0
  %724 = vmatpush1.msra.mxu0 %v170
  %725 = vmatprep.subr.mxu0 0.0
  %726 = vmatpush1.msra.mxu0 %v171
  %727 = vmatprep.subr.mxu0 0.0
  %728 = vmatpush1.msra.mxu0 %v172
  %729 = vmatprep.subr.mxu0 0.0
  %730 = vmatpush1.msra.mxu0 %v173
  %731 = vmatprep.subr.mxu0 0.0
  %732 = vmatpush1.msra.mxu0 %v174
  %733 = vmatprep.subr.mxu0 0.0
  %734 = vmatpush1.msra.mxu0 %v175
  %735 = vmatprep.subr.mxu0 0.0
  %736 = vmatpush1.msra.mxu0 %v176
  %737 = vmatprep.subr.mxu0 0.0
  %738 = vmatpush1.msra.mxu0 %v177
  %739 = vmatprep.subr.mxu0 0.0
  %740 = vmatpush1.msra.mxu0 %v178
  %741 = vmatprep.subr.mxu0 0.0
  %742 = vmatpush1.msra.mxu0 %v179
  %743 = vmatprep.subr.mxu0 0.0
  %744 = vmatpush1.msra.mxu0 %v180
  %745 = vmatprep.subr.mxu0 0.0
  %746 = vmatpush1.msra.mxu0 %v181
  %747 = vmatprep.subr.mxu0 0.0
  %748 = vmatpush1.msra.mxu0 0.0
  %749 = vmatprep.subr.mxu0 0.0
  %750 = vmatpush1.msra.mxu0 0.0
  %751 = vmatprep.subr.mxu0 0.0
  %752 = vmatpush1.msra.mxu0 0.0
  %753 = vmatprep.subr.mxu0 0.0
  %754 = vmatpush1.msra.mxu0 0.0
  %755 = vmatprep.subr.mxu0 0.0
  %756 = vmatpush1.msra.mxu0 0.0
  %757 = vmatprep.subr.mxu0 0.0
  %758 = vmatpush1.msra.mxu0 0.0
  %759 = vmatprep.subr.mxu0 0.0
  %760 = vmatpush1.msra.mxu0 0.0
  %761 = vmatprep.subr.mxu0 0.0
  %762 = vmatpush1.msra.mxu0 0.0
  %763 = vmatprep.subr.mxu0 0.0
  %764 = vmatpush1.msra.mxu0 0.0
  %765 = vmatprep.subr.mxu0 0.0
  %766 = vmatpush1.msra.mxu0 0.0
  %767 = vmatprep.subr.mxu0 0.0
  %768 = vmatpush1.msra.mxu0 0.0
  %769 = vmatprep.subr.mxu0 0.0
  %770 = vmatpush1.msra.mxu0 0.0
  %771 = vmatprep.subr.mxu0 0.0
  %772 = vmatpush1.msra.mxu0 0.0
  %773 = vmatprep.subr.mxu0 0.0
  %774 = vmatpush1.msra.mxu0 0.0
  %775 = vmatprep.subr.mxu0 0.0
  %776 = vmatpush1.msra.mxu0 0.0
  %777 = vmatprep.subr.mxu0 0.0
  %778 = vmatpush1.msra.mxu0 0.0
  %779 = vmatprep.mubr.f32.mxu0 0.0
  %780 = vmatmul.mubr.f32.gmra.mrb[0].mxu0 %v710
  %v781 = vpop.f32.mrb[0].mxu0
  %v782 = vadd.f32 0.0, %v781
  %v783 = vpop.f32.mrb[0].mxu0
  %784 = vdwg.mxu0
  %v785 = vadd.f32 %v714, %v782
  %v786 = vtanh.pop %v785
  %s787 = scalar_lea.vmem %s4, 56
  %788 = vst [vmem:[%s787] sm:$0xff] %v786
  %789 = vst [vmem:[#allocation2] sm:$0xff] %v786
  // Predicated region
  $region22: #{var_masked_rnn_forward.2} parent=0 // pred_check
    _
  $region23: #{var_masked_rnn_forward.2} parent=0 // pred_check_branch
    %791 = sbr.rel (0) target = $region25
  $region24: #{var_masked_rnn_forward.2} parent=0 // pred_region
    _
  $region25: #{var_masked_rnn_forward.2} parent=0 // pred_fallthru
    _
  // Predicated region
  $region26: #{var_masked_rnn_forward.2} parent=0 // pred_check
    _
  $region27: #{var_masked_rnn_forward.2} parent=0 // pred_check_branch
    %793 = sbr.rel (0) target = $region29
  $region28: #{var_masked_rnn_forward.2} parent=0 // pred_region
    _
  $region29: #{var_masked_rnn_forward.2} parent=0 // pred_fallthru
    _

</llo_original>
